<compile_context>
chip_gen: v7x
topology: tpu7x:2x2x1
jax: 0.10.0
libtpu: 0.0.40
codegen_flags: <defaults>
</compile_context>

<pallas_src>
import functools

import jax
import jax.numpy as jnp
from jax.experimental import pallas as pl
from jax.experimental.pallas import tpu as pltpu


def _fused_head_kernel(h_ref, w_ref, b_ref, o_ref):
    """Fused dual-head projection on one M tile.

    h_ref: (tm, H)      VMEM  -- flattened (B*T) rows of hidden states
    w_ref: (H, 128)     VMEM  -- [w_mouth | w_eye | zero-pad] (resident)
    b_ref: (1, 128)     VMEM  -- [b_mouth | b_eye | zero-pad] (resident)
    o_ref: (tm, 128)    VMEM  -- lane-dense fused output
    """
    o_ref[...] = (
        jnp.dot(h_ref[...], w_ref[...], preferred_element_type=jnp.float32)
        + b_ref[...]
    ).astype(o_ref.dtype)


@functools.partial(jax.jit, static_argnames=("tile_m",))
def model2_heads(hidden_states, w_mouth, b_mouth, w_eye, b_eye, *, tile_m=128):
    """hidden_states: (B, T, H) float32
       w_mouth: (H, Cm), b_mouth: (Cm,), w_eye: (H, Ce), b_eye: (Ce,)
       returns (mouth_pred (B,T,Cm), eye_pred (B,T,Ce))"""
    B, T, H = hidden_states.shape
    Cm = w_mouth.shape[1]
    Ce = w_eye.shape[1]
    C = Cm + Ce
    C_pad = 128 * pl.cdiv(C, 128)          # lane-dense fused output width

    # --- fuse both heads into one (H, C_pad) weight + (1, C_pad) bias ---
    w_fused = jnp.zeros((H, C_pad), jnp.float32)
    w_fused = w_fused.at[:, :Cm].set(w_mouth.astype(jnp.float32))
    w_fused = w_fused.at[:, Cm:C].set(w_eye.astype(jnp.float32))
    b_fused = jnp.zeros((1, C_pad), jnp.float32)
    b_fused = b_fused.at[0, :Cm].set(b_mouth.astype(jnp.float32))
    b_fused = b_fused.at[0, Cm:C].set(b_eye.astype(jnp.float32))

    # --- flatten (B, T) -> M and pick an M tile ---
    M = B * T
    if M <= tile_m:
        tm = 8 * pl.cdiv(M, 8)              # single grid step, sublane-aligned
    else:
        tm = tile_m                         # 128-row tiles for realistic T
    M_pad = tm * pl.cdiv(M, tm)

    h2d = hidden_states.reshape(M, H).astype(jnp.float32)
    if M_pad != M:
        h2d = jnp.pad(h2d, ((0, M_pad - M), (0, 0)))

    grid = (M_pad // tm,)

    out = pl.pallas_call(
        _fused_head_kernel,
        out_shape=jax.ShapeDtypeStruct((M_pad, C_pad), jnp.float32),
        grid_spec=pltpu.PrefetchScalarGridSpec(
            num_scalar_prefetch=0,
            grid=grid,
            in_specs=[
                pl.BlockSpec((tm, H), lambda i: (i, 0)),       # hidden rows
                pl.BlockSpec((H, C_pad), lambda i: (0, 0)),    # fused weight (resident)
                pl.BlockSpec((1, C_pad), lambda i: (0, 0)),    # fused bias (resident)
            ],
            out_specs=pl.BlockSpec((tm, C_pad), lambda i: (i, 0)),
        ),
        compiler_params=pltpu.CompilerParams(
            dimension_semantics=("parallel",),
        ),
    )(h2d, w_fused, b_fused)

    mouth_pred = out[:M, :Cm].reshape(B, T, Cm)
    eye_pred = out[:M, Cm:C].reshape(B, T, Ce)
    return mouth_pred, eye_pred


if __name__ == "__main__":
    # Shapes consistent with Model2: hidden_size = 768 (chinese-hubert-base),
    # n_lumi_mouth_channels = 52, n_lumi_eye_channels = 14.
    B, T, H = 2, 8, 768
    CM, CE = 52, 14

    key = jax.random.PRNGKey(0)
    k_h, k_pos, k_wm, k_bm, k_we, k_be = jax.random.split(key, 6)

    # Stand-in for HuBERT last_hidden_state (backbone not translatable).
    hidden_states = jax.random.normal(k_h, (B, T, H), dtype=jnp.float32)

    # Deterministic parameter init mirroring the module's __init__:
    # repeated_position_embedding ~ N(0, 0.02); heads via _init_weights (normal).
    repeated_position_embedding = 0.02 * jax.random.normal(
        k_pos, (H,), dtype=jnp.float32)  # declared for parity; see TODO above
    w_mouth = 0.02 * jax.random.normal(k_wm, (H, CM), dtype=jnp.float32)
    b_mouth = jnp.zeros((CM,), dtype=jnp.float32)
    w_eye = 0.02 * jax.random.normal(k_we, (H, CE), dtype=jnp.float32)
    b_eye = jnp.zeros((CE,), dtype=jnp.float32)

    mouth_pred, eye_pred = model2_heads(
        hidden_states, w_mouth, b_mouth, w_eye, b_eye)
    jax.block_until_ready((mouth_pred, eye_pred))

    # Correctness check against plain-JAX reference of the head linears.
    mouth_ref = hidden_states @ w_mouth + b_mouth
    eye_ref = hidden_states @ w_eye + b_eye
    assert mouth_pred.shape == (B, T, CM)
    assert eye_pred.shape == (B, T, CE)
    assert jnp.allclose(mouth_pred, mouth_ref, atol=1e-4, rtol=1e-4)
    assert jnp.allclose(eye_pred, eye_ref, atol=1e-4, rtol=1e-4)

    print("KERNEL_OK")
</pallas_src>

<mosaic_0001>
module attributes {stable_mosaic.version = 11 : i64} {
  func.func @_fused_head_kernel(%arg0: i32, %arg1: memref<16x768xf32, #tpu.memory_space<vmem>>, %arg2: memref<768x128xf32, #tpu.memory_space<vmem>>, %arg3: memref<1x128xf32, #tpu.memory_space<vmem>>, %arg4: memref<16x128xf32, #tpu.memory_space<vmem>>) attributes {dimension_semantics = [#tpu.dimension_semantics<parallel>], iteration_bounds = array<i64: 1>, scalar_prefetch = 0 : i64, scratch_operands = 0 : i64, tpu.core_type = #tpu.core_type<tc>, window_params = [{transform_indices = @transform_0, window_bounds = array<i64: 16, 768>}, {pipeline_mode = #tpu.pipeline_mode<synchronous>, transform_indices = @transform_1, window_bounds = array<i64: 768, 128>}, {pipeline_mode = #tpu.pipeline_mode<synchronous>, transform_indices = @transform_2, window_bounds = array<i64: 1, 128>}, {transform_indices = @transform_3, window_bounds = array<i64: 16, 128>}]} {
    %c0 = arith.constant 0 : index
    %c0_0 = arith.constant 0 : index
    %0 = vector.load %arg1[%c0, %c0_0] : memref<16x768xf32, #tpu.memory_space<vmem>>, vector<16x768xf32>
    %c0_1 = arith.constant 0 : index
    %c0_2 = arith.constant 0 : index
    %1 = vector.load %arg2[%c0_1, %c0_2] : memref<768x128xf32, #tpu.memory_space<vmem>>, vector<768x128xf32>
    %cst = arith.constant dense<0.000000e+00> : vector<16x128xf32>
    %2 = tpu.matmul %0, %1, %cst {dimension_numbers = #tpu.dot_dimension_numbers<[1], [0], [0], [1], [0, 0, 1, 1], [], []>} : vector<16x768xf32>, vector<768x128xf32>, vector<16x128xf32> -> vector<16x128xf32>
    %c0_3 = arith.constant 0 : index
    %c0_4 = arith.constant 0 : index
    %3 = vector.load %arg3[%c0_3, %c0_4] : memref<1x128xf32, #tpu.memory_space<vmem>>, vector<1x128xf32>
    %4 = vector.broadcast %3 : vector<1x128xf32> to vector<16x128xf32>
    %5 = arith.addf %2, %4 : vector<16x128xf32>
    %c0_5 = arith.constant 0 : index
    %c0_6 = arith.constant 0 : index
    %6 = vector.load %arg4[%c0_5, %c0_6] : memref<16x128xf32, #tpu.memory_space<vmem>>, vector<16x128xf32>
    tpu.vector_store %arg4[%c0_5, %c0_6], %5 {strides = array<i32>} : memref<16x128xf32, #tpu.memory_space<vmem>>, vector<16x128xf32>,
    return
  }
  func.func @transform_0(%arg0: i32) -> (i32, i32) {
    %c0_i32 = arith.constant 0 : i32
    %c0_i32_0 = arith.constant 0 : i32
    return %arg0, %c0_i32 : i32, i32
  }
  func.func @transform_1(%arg0: i32) -> (i32, i32) {
    %c0_i32 = arith.constant 0 : i32
    %c0_i32_0 = arith.constant 0 : i32
    %c0_i32_1 = arith.constant 0 : i32
    return %c0_i32, %c0_i32_0 : i32, i32
  }
  func.func @transform_2(%arg0: i32) -> (i32, i32) {
    %c0_i32 = arith.constant 0 : i32
    %c0_i32_0 = arith.constant 0 : i32
    %c0_i32_1 = arith.constant 0 : i32
    return %c0_i32, %c0_i32_0 : i32, i32
  }
  func.func @transform_3(%arg0: i32) -> (i32, i32) {
    %c0_i32 = arith.constant 0 : i32
    %c0_i32_0 = arith.constant 0 : i32
    return %arg0, %c0_i32 : i32, i32
  }
}

</mosaic_0001>

<llo_original>
// kernel: model2_heads.1
$region0: #{model2_heads.1}
  #allocation0 [shape = 'u32[]', space=smem, size = 0x4, offset = 0x4, fixed_abs, tag = 'smem constant byte address 0x4 - core index']
  #allocation1 [shape = 'u32[144,128]{1,0:T(1,128)}', space=vmem, size = 0x12000, scoped, tag = 'internal scratch']
  %s0 = inlined_call_operand.vmem [shape: f32[16,768], index: 0, kind: input, shape index: {}]
  %s1 = inlined_call_operand.vmem [shape: f32[768,128], index: 1, kind: input, shape index: {}]
  %s2 = inlined_call_operand.vmem [shape: f32[1,128], index: 2, kind: input, shape index: {}]
  %s3 = inlined_call_operand.vmem [shape: f32[16,128], index: 3, kind: output, shape index: {}]
  %s4 = sld [smem:[#allocation0]]
  $region22: #{model2_heads.1} parent=0
    _
  %s6 = ssub.s32 1, %s4
  %s7 = scalar_select 0, %s6, %s4
  // Predicated region
  $region2: #{model2_heads.1} parent=0 // pred_check
    _
  $region3: #{model2_heads.1} parent=0 // pred_check_branch
    %9 = sbr.rel (0) target = $region5
  $region4: #{model2_heads.1} parent=0 // pred_region
    _
  $region5: #{model2_heads.1} parent=0 // pred_fallthru
    _
  // Predicated region
  $region6: #{model2_heads.1} parent=0 // pred_check
    _
  $region7: #{model2_heads.1} parent=0 // pred_check_branch
    %11 = sbr.rel (0) target = $region9
  $region8: #{model2_heads.1} parent=0 // pred_region
    _
  $region9: #{model2_heads.1} parent=0 // pred_fallthru
    _
  // Predicated region
  $region10: #{model2_heads.1} parent=0 // pred_check
    _
  $region11: #{model2_heads.1} parent=0 // pred_check_branch
    %13 = sbr.rel (0) target = $region13
  $region12: #{model2_heads.1} parent=0 // pred_region
    _
  $region13: #{model2_heads.1} parent=0 // pred_fallthru
    _
  %v14 = vld [vmem:[%s0] sm:$0xff]
  %v15 = vld [vmem:[%s0 + $0x8] sm:$0xff]
  %v16 = vld [vmem:[%s0 + $0x10] sm:$0xff]
  %v17 = vld [vmem:[%s0 + $0x18] sm:$0xff]
  %v18 = vld [vmem:[%s0 + $0x20] sm:$0xff]
  %v19 = vld [vmem:[%s0 + $0x28] sm:$0xff]
  %v20 = vld [vmem:[%s0 + $0x30] sm:$0xff]
  %v21 = vld [vmem:[%s0 + $0x38] sm:$0xff]
  %v22 = vld [vmem:[%s0 + $0x40] sm:$0xff]
  %v23 = vld [vmem:[%s0 + $0x48] sm:$0xff]
  %v24 = vld [vmem:[%s0 + $0x50] sm:$0xff]
  %v25 = vld [vmem:[%s0 + $0x58] sm:$0xff]
  %v26 = vld [vmem:[%s1] sm:$0xff]
  %v27 = vld [vmem:[%s1 + $0x8] sm:$0xff]
  %v28 = vld [vmem:[%s1 + $0x10] sm:$0xff]
  %v29 = vld [vmem:[%s1 + $0x18] sm:$0xff]
  %v30 = vld [vmem:[%s1 + $0x20] sm:$0xff]
  %v31 = vld [vmem:[%s1 + $0x28] sm:$0xff]
  %v32 = vld [vmem:[%s1 + $0x30] sm:$0xff]
  %v33 = vld [vmem:[%s1 + $0x38] sm:$0xff]
  %v34 = vld [vmem:[%s1 + $0x40] sm:$0xff]
  %v35 = vld [vmem:[%s1 + $0x48] sm:$0xff]
  %v36 = vld [vmem:[%s1 + $0x50] sm:$0xff]
  %v37 = vld [vmem:[%s1 + $0x58] sm:$0xff]
  %v38 = vld [vmem:[%s1 + $0x60] sm:$0xff]
  %v39 = vld [vmem:[%s1 + $0x68] sm:$0xff]
  %v40 = vld [vmem:[%s1 + $0x70] sm:$0xff]
  %v41 = vld [vmem:[%s1 + $0x78] sm:$0xff]
  %v42 = vld [vmem:[%s1 + $0x80] sm:$0xff]
  %v43 = vld [vmem:[%s1 + $0x88] sm:$0xff]
  %v44 = vld [vmem:[%s1 + $0x90] sm:$0xff]
  %v45 = vld [vmem:[%s1 + $0x98] sm:$0xff]
  %v46 = vld [vmem:[%s1 + $0xa0] sm:$0xff]
  %v47 = vld [vmem:[%s1 + $0xa8] sm:$0xff]
  %v48 = vld [vmem:[%s1 + $0xb0] sm:$0xff]
  %v49 = vld [vmem:[%s1 + $0xb8] sm:$0xff]
  %v50 = vld [vmem:[%s1 + $0xc0] sm:$0xff]
  %v51 = vld [vmem:[%s1 + $0xc8] sm:$0xff]
  %v52 = vld [vmem:[%s1 + $0xd0] sm:$0xff]
  %v53 = vld [vmem:[%s1 + $0xd8] sm:$0xff]
  %v54 = vld [vmem:[%s1 + $0xe0] sm:$0xff]
  %v55 = vld [vmem:[%s1 + $0xe8] sm:$0xff]
  %v56 = vld [vmem:[%s1 + $0xf0] sm:$0xff]
  %v57 = vld [vmem:[%s1 + $0xf8] sm:$0xff]
  %v58 = vld [vmem:[%s1 + $0x100] sm:$0xff]
  %v59 = vld [vmem:[%s1 + $0x108] sm:$0xff]
  %v60 = vld [vmem:[%s1 + $0x110] sm:$0xff]
  %v61 = vld [vmem:[%s1 + $0x118] sm:$0xff]
  %v62 = vld [vmem:[%s1 + $0x120] sm:$0xff]
  %v63 = vld [vmem:[%s1 + $0x128] sm:$0xff]
  %v64 = vld [vmem:[%s1 + $0x130] sm:$0xff]
  %v65 = vld [vmem:[%s1 + $0x138] sm:$0xff]
  %v66 = vld [vmem:[%s1 + $0x140] sm:$0xff]
  %v67 = vld [vmem:[%s1 + $0x148] sm:$0xff]
  %v68 = vld [vmem:[%s1 + $0x150] sm:$0xff]
  %v69 = vld [vmem:[%s1 + $0x158] sm:$0xff]
  %v70 = vld [vmem:[%s1 + $0x160] sm:$0xff]
  %v71 = vld [vmem:[%s1 + $0x168] sm:$0xff]
  %v72 = vld [vmem:[%s1 + $0x170] sm:$0xff]
  %v73 = vld [vmem:[%s1 + $0x178] sm:$0xff]
  %v74 = vld [vmem:[%s1 + $0x180] sm:$0xff]
  %v75 = vld [vmem:[%s1 + $0x188] sm:$0xff]
  %v76 = vld [vmem:[%s1 + $0x190] sm:$0xff]
  %v77 = vld [vmem:[%s1 + $0x198] sm:$0xff]
  %v78 = vld [vmem:[%s1 + $0x1a0] sm:$0xff]
  %v79 = vld [vmem:[%s1 + $0x1a8] sm:$0xff]
  %v80 = vld [vmem:[%s1 + $0x1b0] sm:$0xff]
  %v81 = vld [vmem:[%s1 + $0x1b8] sm:$0xff]
  %v82 = vld [vmem:[%s1 + $0x1c0] sm:$0xff]
  %v83 = vld [vmem:[%s1 + $0x1c8] sm:$0xff]
  %v84 = vld [vmem:[%s1 + $0x1d0] sm:$0xff]
  %v85 = vld [vmem:[%s1 + $0x1d8] sm:$0xff]
  %v86 = vld [vmem:[%s1 + $0x1e0] sm:$0xff]
  %v87 = vld [vmem:[%s1 + $0x1e8] sm:$0xff]
  %v88 = vld [vmem:[%s1 + $0x1f0] sm:$0xff]
  %v89 = vld [vmem:[%s1 + $0x1f8] sm:$0xff]
  %v90 = vld [vmem:[%s1 + $0x200] sm:$0xff]
  %v91 = vld [vmem:[%s1 + $0x208] sm:$0xff]
  %v92 = vld [vmem:[%s1 + $0x210] sm:$0xff]
  %v93 = vld [vmem:[%s1 + $0x218] sm:$0xff]
  %v94 = vld [vmem:[%s1 + $0x220] sm:$0xff]
  %v95 = vld [vmem:[%s1 + $0x228] sm:$0xff]
  %v96 = vld [vmem:[%s1 + $0x230] sm:$0xff]
  %v97 = vld [vmem:[%s1 + $0x238] sm:$0xff]
  %v98 = vld [vmem:[%s1 + $0x240] sm:$0xff]
  %v99 = vld [vmem:[%s1 + $0x248] sm:$0xff]
  %v100 = vld [vmem:[%s1 + $0x250] sm:$0xff]
  %v101 = vld [vmem:[%s1 + $0x258] sm:$0xff]
  %v102 = vld [vmem:[%s1 + $0x260] sm:$0xff]
  %v103 = vld [vmem:[%s1 + $0x268] sm:$0xff]
  %v104 = vld [vmem:[%s1 + $0x270] sm:$0xff]
  %v105 = vld [vmem:[%s1 + $0x278] sm:$0xff]
  %v106 = vld [vmem:[%s1 + $0x280] sm:$0xff]
  %v107 = vld [vmem:[%s1 + $0x288] sm:$0xff]
  %v108 = vld [vmem:[%s1 + $0x290] sm:$0xff]
  %v109 = vld [vmem:[%s1 + $0x298] sm:$0xff]
  %v110 = vld [vmem:[%s1 + $0x2a0] sm:$0xff]
  %v111 = vld [vmem:[%s1 + $0x2a8] sm:$0xff]
  %v112 = vld [vmem:[%s1 + $0x2b0] sm:$0xff]
  %v113 = vld [vmem:[%s1 + $0x2b8] sm:$0xff]
  %v114 = vld [vmem:[%s1 + $0x2c0] sm:$0xff]
  %v115 = vld [vmem:[%s1 + $0x2c8] sm:$0xff]
  %v116 = vld [vmem:[%s1 + $0x2d0] sm:$0xff]
  %v117 = vld [vmem:[%s1 + $0x2d8] sm:$0xff]
  %v118 = vld [vmem:[%s1 + $0x2e0] sm:$0xff]
  %v119 = vld [vmem:[%s1 + $0x2e8] sm:$0xff]
  %v120 = vld [vmem:[%s1 + $0x2f0] sm:$0xff]
  %v121 = vld [vmem:[%s1 + $0x2f8] sm:$0xff]
  %v122 = vld [vmem:[%s2] sm:$0x1]
  %v124 = vlaneseq
  %v125 = vshrl.u32 %v124, 7
  %v126 = vsub.s32 0, %v125
  %v127 = vrot.slane %v122, %v126
  %129 = vmatprep.subr.mxu0 0.0
  %130 = vmatpush1.msra.mxu0 %v26
  %131 = vmatprep.subr.mxu0 0.0
  %132 = vmatpush1.msra.mxu0 %v27
  %133 = vmatprep.subr.mxu0 0.0
  %134 = vmatpush1.msra.mxu0 %v28
  %135 = vmatprep.subr.mxu0 0.0
  %136 = vmatpush1.msra.mxu0 %v29
  %137 = vmatprep.subr.mxu0 0.0
  %138 = vmatpush1.msra.mxu0 %v30
  %139 = vmatprep.subr.mxu0 0.0
  %140 = vmatpush1.msra.mxu0 %v31
  %141 = vmatprep.subr.mxu0 0.0
  %142 = vmatpush1.msra.mxu0 %v32
  %143 = vmatprep.subr.mxu0 0.0
  %144 = vmatpush1.msra.mxu0 %v33
  %145 = vmatprep.subr.mxu0 0.0
  %146 = vmatpush1.msra.mxu0 %v34
  %147 = vmatprep.subr.mxu0 0.0
  %148 = vmatpush1.msra.mxu0 %v35
  %149 = vmatprep.subr.mxu0 0.0
  %150 = vmatpush1.msra.mxu0 %v36
  %151 = vmatprep.subr.mxu0 0.0
  %152 = vmatpush1.msra.mxu0 %v37
  %153 = vmatprep.subr.mxu0 0.0
  %154 = vmatpush1.msra.mxu0 %v38
  %155 = vmatprep.subr.mxu0 0.0
  %156 = vmatpush1.msra.mxu0 %v39
  %157 = vmatprep.subr.mxu0 0.0
  %158 = vmatpush1.msra.mxu0 %v40
  %159 = vmatprep.subr.mxu0 0.0
  %160 = vmatpush1.msra.mxu0 %v41
  %161 = vmatprep.subr.mxu0 0.0
  %162 = vmatpush1.msra.mxu0 %v42
  %163 = vmatprep.subr.mxu0 0.0
  %164 = vmatpush1.msra.mxu0 %v43
  %165 = vmatprep.subr.mxu0 0.0
  %166 = vmatpush1.msra.mxu0 %v44
  %167 = vmatprep.subr.mxu0 0.0
  %168 = vmatpush1.msra.mxu0 %v45
  %169 = vmatprep.subr.mxu0 0.0
  %170 = vmatpush1.msra.mxu0 %v46
  %171 = vmatprep.subr.mxu0 0.0
  %172 = vmatpush1.msra.mxu0 %v47
  %173 = vmatprep.subr.mxu0 0.0
  %174 = vmatpush1.msra.mxu0 %v48
  %175 = vmatprep.subr.mxu0 0.0
  %176 = vmatpush1.msra.mxu0 %v49
  %177 = vmatprep.subr.mxu0 0.0
  %178 = vmatpush1.msra.mxu0 %v50
  %179 = vmatprep.subr.mxu0 0.0
  %180 = vmatpush1.msra.mxu0 %v51
  %181 = vmatprep.subr.mxu0 0.0
  %182 = vmatpush1.msra.mxu0 %v52
  %183 = vmatprep.subr.mxu0 0.0
  %184 = vmatpush1.msra.mxu0 %v53
  %185 = vmatprep.subr.mxu0 0.0
  %186 = vmatpush1.msra.mxu0 %v54
  %187 = vmatprep.subr.mxu0 0.0
  %188 = vmatpush1.msra.mxu0 %v55
  %189 = vmatprep.subr.mxu0 0.0
  %190 = vmatpush1.msra.mxu0 %v56
  %191 = vmatprep.subr.mxu0 0.0
  %192 = vmatpush1.msra.mxu0 %v57
  %193 = vmatprep.mubr.f32.mxu0 %v15
  %194 = vmatmul.mubr.f32.gmra.mrb[0].mxu0 %v14
  %v195 = vpop.f32.mrb[0].mxu0
  %v196 = vadd.f32 %v127, %v195
  %v197 = vpop.f32.mrb[0].mxu0
  %198 = vmatprep.mubr.f32.mxu0 %v21
  %199 = vmatmul.mubr.f32.gmra.mrb[0].mxu0 %v20
  %v200 = vpop.f32.mrb[0].mxu0
  %v201 = vadd.f32 %v127, %v200
  %v202 = vpop.f32.mrb[0].mxu0
  %203 = vdwg.mxu0
  %204 = vmatprep.subr.mxu0 0.0
  %205 = vmatpush1.msra.mxu0 %v58
  %206 = vmatprep.subr.mxu0 0.0
  %207 = vmatpush1.msra.mxu0 %v59
  %208 = vmatprep.subr.mxu0 0.0
  %209 = vmatpush1.msra.mxu0 %v60
  %210 = vmatprep.subr.mxu0 0.0
  %211 = vmatpush1.msra.mxu0 %v61
  %212 = vmatprep.subr.mxu0 0.0
  %213 = vmatpush1.msra.mxu0 %v62
  %214 = vmatprep.subr.mxu0 0.0
  %215 = vmatpush1.msra.mxu0 %v63
  %216 = vmatprep.subr.mxu0 0.0
  %217 = vmatpush1.msra.mxu0 %v64
  %218 = vmatprep.subr.mxu0 0.0
  %219 = vmatpush1.msra.mxu0 %v65
  %220 = vmatprep.subr.mxu0 0.0
  %221 = vmatpush1.msra.mxu0 %v66
  %222 = vmatprep.subr.mxu0 0.0
  %223 = vmatpush1.msra.mxu0 %v67
  %224 = vmatprep.subr.mxu0 0.0
  %225 = vmatpush1.msra.mxu0 %v68
  %226 = vmatprep.subr.mxu0 0.0
  %227 = vmatpush1.msra.mxu0 %v69
  %228 = vmatprep.subr.mxu0 0.0
  %229 = vmatpush1.msra.mxu0 %v70
  %230 = vmatprep.subr.mxu0 0.0
  %231 = vmatpush1.msra.mxu0 %v71
  %232 = vmatprep.subr.mxu0 0.0
  %233 = vmatpush1.msra.mxu0 %v72
  %234 = vmatprep.subr.mxu0 0.0
  %235 = vmatpush1.msra.mxu0 %v73
  %236 = vmatprep.subr.mxu0 0.0
  %237 = vmatpush1.msra.mxu0 %v74
  %238 = vmatprep.subr.mxu0 0.0
  %239 = vmatpush1.msra.mxu0 %v75
  %240 = vmatprep.subr.mxu0 0.0
  %241 = vmatpush1.msra.mxu0 %v76
  %242 = vmatprep.subr.mxu0 0.0
  %243 = vmatpush1.msra.mxu0 %v77
  %244 = vmatprep.subr.mxu0 0.0
  %245 = vmatpush1.msra.mxu0 %v78
  %246 = vmatprep.subr.mxu0 0.0
  %247 = vmatpush1.msra.mxu0 %v79
  %248 = vmatprep.subr.mxu0 0.0
  %249 = vmatpush1.msra.mxu0 %v80
  %250 = vmatprep.subr.mxu0 0.0
  %251 = vmatpush1.msra.mxu0 %v81
  %252 = vmatprep.subr.mxu0 0.0
  %253 = vmatpush1.msra.mxu0 %v82
  %254 = vmatprep.subr.mxu0 0.0
  %255 = vmatpush1.msra.mxu0 %v83
  %256 = vmatprep.subr.mxu0 0.0
  %257 = vmatpush1.msra.mxu0 %v84
  %258 = vmatprep.subr.mxu0 0.0
  %259 = vmatpush1.msra.mxu0 %v85
  %260 = vmatprep.subr.mxu0 0.0
  %261 = vmatpush1.msra.mxu0 %v86
  %262 = vmatprep.subr.mxu0 0.0
  %263 = vmatpush1.msra.mxu0 %v87
  %264 = vmatprep.subr.mxu0 0.0
  %265 = vmatpush1.msra.mxu0 %v88
  %266 = vmatprep.subr.mxu0 0.0
  %267 = vmatpush1.msra.mxu0 %v89
  %268 = vmatprep.mubr.f32.mxu0 %v17
  %269 = vmatmul.mubr.f32.gmra.mrb[0].mxu0 %v16
  %v270 = vpop.f32.mrb[0].mxu0
  %v271 = vadd.f32 %v196, %v270
  %v272 = vpop.f32.mrb[0].mxu0
  %273 = vmatprep.mubr.f32.mxu0 %v23
  %274 = vmatmul.mubr.f32.gmra.mrb[0].mxu0 %v22
  %v275 = vpop.f32.mrb[0].mxu0
  %v276 = vadd.f32 %v201, %v275
  %v277 = vpop.f32.mrb[0].mxu0
  %278 = vdwg.mxu0
  %279 = vmatprep.subr.mxu0 0.0
  %280 = vmatpush1.msra.mxu0 %v90
  %281 = vmatprep.subr.mxu0 0.0
  %282 = vmatpush1.msra.mxu0 %v91
  %283 = vmatprep.subr.mxu0 0.0
  %284 = vmatpush1.msra.mxu0 %v92
  %285 = vmatprep.subr.mxu0 0.0
  %286 = vmatpush1.msra.mxu0 %v93
  %287 = vmatprep.subr.mxu0 0.0
  %288 = vmatpush1.msra.mxu0 %v94
  %289 = vmatprep.subr.mxu0 0.0
  %290 = vmatpush1.msra.mxu0 %v95
  %291 = vmatprep.subr.mxu0 0.0
  %292 = vmatpush1.msra.mxu0 %v96
  %293 = vmatprep.subr.mxu0 0.0
  %294 = vmatpush1.msra.mxu0 %v97
  %295 = vmatprep.subr.mxu0 0.0
  %296 = vmatpush1.msra.mxu0 %v98
  %297 = vmatprep.subr.mxu0 0.0
  %298 = vmatpush1.msra.mxu0 %v99
  %299 = vmatprep.subr.mxu0 0.0
  %300 = vmatpush1.msra.mxu0 %v100
  %301 = vmatprep.subr.mxu0 0.0
  %302 = vmatpush1.msra.mxu0 %v101
  %303 = vmatprep.subr.mxu0 0.0
  %304 = vmatpush1.msra.mxu0 %v102
  %305 = vmatprep.subr.mxu0 0.0
  %306 = vmatpush1.msra.mxu0 %v103
  %307 = vmatprep.subr.mxu0 0.0
  %308 = vmatpush1.msra.mxu0 %v104
  %309 = vmatprep.subr.mxu0 0.0
  %310 = vmatpush1.msra.mxu0 %v105
  %311 = vmatprep.subr.mxu0 0.0
  %312 = vmatpush1.msra.mxu0 %v106
  %313 = vmatprep.subr.mxu0 0.0
  %314 = vmatpush1.msra.mxu0 %v107
  %315 = vmatprep.subr.mxu0 0.0
  %316 = vmatpush1.msra.mxu0 %v108
  %317 = vmatprep.subr.mxu0 0.0
  %318 = vmatpush1.msra.mxu0 %v109
  %319 = vmatprep.subr.mxu0 0.0
  %320 = vmatpush1.msra.mxu0 %v110
  %321 = vmatprep.subr.mxu0 0.0
  %322 = vmatpush1.msra.mxu0 %v111
  %323 = vmatprep.subr.mxu0 0.0
  %324 = vmatpush1.msra.mxu0 %v112
  %325 = vmatprep.subr.mxu0 0.0
  %326 = vmatpush1.msra.mxu0 %v113
  %327 = vmatprep.subr.mxu0 0.0
  %328 = vmatpush1.msra.mxu0 %v114
  %329 = vmatprep.subr.mxu0 0.0
  %330 = vmatpush1.msra.mxu0 %v115
  %331 = vmatprep.subr.mxu0 0.0
  %332 = vmatpush1.msra.mxu0 %v116
  %333 = vmatprep.subr.mxu0 0.0
  %334 = vmatpush1.msra.mxu0 %v117
  %335 = vmatprep.subr.mxu0 0.0
  %336 = vmatpush1.msra.mxu0 %v118
  %337 = vmatprep.subr.mxu0 0.0
  %338 = vmatpush1.msra.mxu0 %v119
  %339 = vmatprep.subr.mxu0 0.0
  %340 = vmatpush1.msra.mxu0 %v120
  %341 = vmatprep.subr.mxu0 0.0
  %342 = vmatpush1.msra.mxu0 %v121
  %343 = vmatprep.mubr.f32.mxu0 %v19
  %344 = vmatmul.mubr.f32.gmra.mrb[0].mxu0 %v18
  %v345 = vpop.f32.mrb[0].mxu0
  %v346 = vadd.f32 %v271, %v345
  %v347 = vpop.f32.mrb[0].mxu0
  %348 = vmatprep.mubr.f32.mxu0 %v25
  %349 = vmatmul.mubr.f32.gmra.mrb[0].mxu0 %v24
  %v350 = vpop.f32.mrb[0].mxu0
  %v351 = vadd.f32 %v276, %v350
  %v352 = vpop.f32.mrb[0].mxu0
  %353 = vdwg.mxu0
  %354 = vst [vmem:[%s3] sm:$0xff] %v346
  %355 = vst [vmem:[%s3 + $0x8] sm:$0xff] %v351
  // Predicated region
  $region14: #{model2_heads.1} parent=0 // pred_check
    _
  $region15: #{model2_heads.1} parent=0 // pred_check_branch
    %357 = sbr.rel (0) target = $region17
  $region16: #{model2_heads.1} parent=0 // pred_region
    _
  $region17: #{model2_heads.1} parent=0 // pred_fallthru
    _
  // Predicated region
  $region18: #{model2_heads.1} parent=0 // pred_check
    _
  $region19: #{model2_heads.1} parent=0 // pred_check_branch
    %359 = sbr.rel (0) target = $region21
  $region20: #{model2_heads.1} parent=0 // pred_region
    _
  $region21: #{model2_heads.1} parent=0 // pred_fallthru
    _

</llo_original>
